<compile_context>
chip_gen: v7x
topology: tpu7x:2x2x1
jax: 0.10.0
libtpu: 0.0.40
codegen_flags: <defaults>
</compile_context>

<pallas_src>
import jax
import jax.numpy as jnp
from jax.experimental import pallas as pl
from jax.experimental.pallas import tpu as pltpu


def _vignette_kernel(inv2s2_ref, d2_ref, x_ref, o_ref):
    """One (spatial-tile, batch) block.

    inv2s2_ref : SMEM (B,) f32, scalar-prefetched 1/(2*sigma_b^2)
    d2_ref     : VMEM (1, TL) f32, squared distance from the kernel center
                 (block index constant over the inner batch axis -> DMA'd once
                 per spatial tile, reused across the whole batch)
    x_ref/o_ref: VMEM (1, C, TL)
    """
    b = pl.program_id(1)                         # batch is the inner grid axis
    inv2s2 = inv2s2_ref[b]

    # (1, TL) vignette; one exp per pixel (EUP), reused over all C channels.
    vign = 1.0 - jnp.exp(-(d2_ref[...] * inv2s2))

    xv = x_ref[...]                              # (1, C, TL), native dtype
    # Multiply in x's dtype (keeps bf16 on the native VPU path on v6e/v7x).
    o_ref[...] = (xv * vign[:, None, :].astype(xv.dtype)).astype(o_ref.dtype)


def _pick_spatial_tile(hw_pad: int, c: int, dtype,
                       target_block_bytes: int = 8 << 20,
                       vmem_budget_bytes: int = 40 << 20) -> int:
    """Largest multiple-of-128 divisor of hw_pad whose *physically padded*
    (1, C, tl) block is <= target_block_bytes and whose total double-buffered
    footprint (in + out x-blocks + d2 blocks) fits the VMEM budget.

    The budget is sized for v7x (64 MiB VMEM per TC); v5e/v6e have 128 MiB.
    """
    itemsize = jnp.dtype(dtype).itemsize
    sublane = max(8, 32 // itemsize)             # f32 -> 8, bf16 -> 16, i8 -> 32
    c_pad = -(-c // sublane) * sublane           # physical sublane padding of C
    n = hw_pad // 128
    best = 128
    for m in range(1, n + 1):
        if n % m:
            continue
        tl = m * 128
        x_blk = c_pad * tl * itemsize            # one padded (1, C, tl) buffer
        d2_blk = 8 * tl * 4                      # (1, tl) f32 pads to 8 sublanes
        footprint = 4 * x_blk + 2 * d2_blk       # double-buffered in+out + d2
        if x_blk <= target_block_bytes and footprint <= vmem_budget_bytes:
            best = tl
    return best


def vignette_forward(x, t, max_sigma):
    """x: (B, C, H, W), t: (B,). Returns x * vignette(t), same shape/dtype."""
    B, C, H, W = x.shape
    assert H == W, "Vignette assumes square images (image_size x image_size)."
    HW = H * W
    HW_pad = -(-HW // 128) * 128                 # lane-dense, unmasked stores

    # Static squared-distance map (matches tgm get_gaussian_kernel2d + crop).
    if H % 2 == 0:
        ksize, off = H + 1, 1
    else:
        ksize, off = H, 0
    center = ksize // 2
    coords = jnp.arange(H, dtype=jnp.float32) + (off - center)
    d2 = (coords[:, None] ** 2 + coords[None, :] ** 2).reshape(1, HW)   # (1, HW)

    # Per-batch scalar 1/(2*sigma^2) precomputed -> no divide in the kernel.
    sigmas = (max_sigma * t).astype(jnp.float32)
    inv2s2 = 1.0 / (2.0 * sigmas * sigmas)                              # (B,)

    x_flat = x.reshape(B, C, HW)
    if HW_pad != HW:
        pad = HW_pad - HW
        x_flat = jnp.pad(x_flat, ((0, 0), (0, 0), (0, pad)))
        d2 = jnp.pad(d2, ((0, 0), (0, pad)))

    tl = _pick_spatial_tile(HW_pad, C, x.dtype)
    # Spatial axis leads (balanced v7x megacore split); batch is the inner
    # axis so the d2 block index only changes once per spatial tile.
    grid = (HW_pad // tl, B)

    out_flat = pl.pallas_call(
        _vignette_kernel,
        out_shape=jax.ShapeDtypeStruct((B, C, HW_pad), x.dtype),
        grid_spec=pltpu.PrefetchScalarGridSpec(
            num_scalar_prefetch=1,  # inv2s2 -> SMEM
            grid=grid,
            in_specs=[
                # d2 tile: index depends only on s -> re-DMA'd only when the
                # spatial tile changes (once total per tile), reused over B.
                pl.BlockSpec((1, tl), lambda s, b, inv: (0, s)),
                # Lane-dense image tile: full C, tl-wide spatial slab.
                pl.BlockSpec((1, C, tl), lambda s, b, inv: (b, 0, s)),
            ],
            out_specs=pl.BlockSpec((1, C, tl), lambda s, b, inv: (b, 0, s)),
        ),
        compiler_params=pltpu.CompilerParams(
            dimension_semantics=("parallel", "parallel"),
            vmem_limit_bytes=48 * 1024 * 1024,   # tiles budgeted to <=40 MiB
        ),
    )(inv2s2, d2, x_flat)

    if HW_pad != HW:
        out_flat = out_flat[:, :, :HW]
    return out_flat.reshape(B, C, H, W)


def _reference(x, t, max_sigma):
    """Pure-JAX reference matching the PyTorch module."""
    B, C, H, W = x.shape
    if H % 2 == 0:
        K, off = H + 1, 1
    else:
        K, off = H, 0
    center = K // 2
    coords = jnp.arange(H, dtype=jnp.float32) + (off - center)
    d2 = coords[:, None] ** 2 + coords[None, :] ** 2                    # (H, W)
    sig = (max_sigma * t).astype(jnp.float32)                           # (B,)
    vig = 1.0 - jnp.exp(-d2[None] / (2.0 * sig[:, None, None] ** 2))    # (B, H, W)
    return (x * vig[:, None, :, :]).astype(x.dtype)


if __name__ == "__main__":
    key = jax.random.PRNGKey(0)
    kx, kt, kx2 = jax.random.split(key, 3)

    B, C, H, W = 2, 4, 16, 16
    max_sigma = 8.0

    x = jax.random.normal(kx, (B, C, H, W), dtype=jnp.float32)
    # t in (0, 1]; sigma == 0 is undefined in the original module as well.
    t = jax.random.uniform(kt, (B,), dtype=jnp.float32, minval=0.1, maxval=1.0)

    out = vignette_forward(x, t, max_sigma)
    out = jax.block_until_ready(out)
    ref = _reference(x, t, max_sigma)
    assert out.shape == (B, C, H, W)
    assert jnp.allclose(out, ref, atol=1e-5, rtol=1e-5)

    # Also exercise the H*W % 128 != 0 padding path (lane-dense padded stores).
    H2 = W2 = 10
    x2 = jax.random.normal(kx2, (B, C, H2, W2), dtype=jnp.float32)
    out2 = jax.block_until_ready(vignette_forward(x2, t, max_sigma))
    ref2 = _reference(x2, t, max_sigma)
    assert out2.shape == (B, C, H2, W2)
    assert jnp.allclose(out2, ref2, atol=1e-5, rtol=1e-5)

    print("KERNEL_OK")
</pallas_src>

<mosaic_0001>
module attributes {stable_mosaic.version = 11 : i64} {
  func.func @_vignette_kernel(%arg0: i32, %arg1: i32, %arg2: memref<2xf32, #tpu.memory_space<smem>>, %arg3: memref<1x256xf32, #tpu.memory_space<vmem>>, %arg4: memref<1x4x256xf32, #tpu.memory_space<vmem>>, %arg5: memref<1x4x256xf32, #tpu.memory_space<vmem>>) attributes {dimension_semantics = [#tpu.dimension_semantics<parallel>, #tpu.dimension_semantics<parallel>], iteration_bounds = array<i64: 1, 2>, scalar_prefetch = 1 : i64, scratch_operands = 0 : i64, tpu.core_type = #tpu.core_type<tc>, window_params = [{transform_indices = @transform_0, window_bounds = array<i64: 1, 256>}, {transform_indices = @transform_1, window_bounds = array<i64: 1, 4, 256>}, {transform_indices = @transform_2, window_bounds = array<i64: 1, 4, 256>}]} {
    %0 = arith.index_cast %arg1 : i32 to index
    %1 = memref.load %arg2[%0] : memref<2xf32, #tpu.memory_space<smem>>
    %c0 = arith.constant 0 : index
    %c0_0 = arith.constant 0 : index
    %2 = vector.load %arg3[%c0, %c0_0] : memref<1x256xf32, #tpu.memory_space<vmem>>, vector<1x256xf32>
    %3 = vector.broadcast %1 : f32 to vector<1x256xf32>
    %4 = arith.mulf %2, %3 : vector<1x256xf32>
    %cst = arith.constant 0.000000e+00 : f32
    %5 = vector.broadcast %cst : f32 to vector<1x256xf32>
    %6 = arith.subf %5, %4 : vector<1x256xf32>
    %7 = math.exp %6 : vector<1x256xf32>
    %cst_1 = arith.constant 1.000000e+00 : f32
    %8 = vector.broadcast %cst_1 : f32 to vector<1x256xf32>
    %9 = arith.subf %8, %7 : vector<1x256xf32>
    %c0_2 = arith.constant 0 : index
    %c0_3 = arith.constant 0 : index
    %c0_4 = arith.constant 0 : index
    %10 = vector.load %arg4[%c0_2, %c0_3, %c0_4] : memref<1x4x256xf32, #tpu.memory_space<vmem>>, vector<1x4x256xf32>
    %11 = vector.shape_cast %9 : vector<1x256xf32> to vector<1x1x256xf32>
    %12 = vector.broadcast %11 : vector<1x1x256xf32> to vector<1x4x256xf32>
    %13 = arith.mulf %10, %12 : vector<1x4x256xf32>
    %c0_5 = arith.constant 0 : index
    %c0_6 = arith.constant 0 : index
    %c0_7 = arith.constant 0 : index
    %14 = vector.load %arg5[%c0_5, %c0_6, %c0_7] : memref<1x4x256xf32, #tpu.memory_space<vmem>>, vector<1x4x256xf32>
    tpu.vector_store %arg5[%c0_5, %c0_6, %c0_7], %13 {strides = array<i32>} : memref<1x4x256xf32, #tpu.memory_space<vmem>>, vector<1x4x256xf32>,
    return
  }
  func.func @transform_0(%arg0: i32, %arg1: i32, %arg2: memref<2xf32, #tpu.memory_space<smem>>) -> (i32, i32) {
    %c0_i32 = arith.constant 0 : i32
    %c0_i32_0 = arith.constant 0 : i32
    return %c0_i32, %arg0 : i32, i32
  }
  func.func @transform_1(%arg0: i32, %arg1: i32, %arg2: memref<2xf32, #tpu.memory_space<smem>>) -> (i32, i32, i32) {
    %c0_i32 = arith.constant 0 : i32
    %c0_i32_0 = arith.constant 0 : i32
    return %arg1, %c0_i32, %arg0 : i32, i32, i32
  }
  func.func @transform_2(%arg0: i32, %arg1: i32, %arg2: memref<2xf32, #tpu.memory_space<smem>>) -> (i32, i32, i32) {
    %c0_i32 = arith.constant 0 : i32
    %c0_i32_0 = arith.constant 0 : i32
    return %arg1, %c0_i32, %arg0 : i32, i32, i32
  }
}

</mosaic_0001>

<llo_original>
// kernel: tpu_custom_call.1
$region0: #{tpu_custom_call.1}
  #allocation0 [shape = 'u32[]', space=smem, size = 0x4, offset = 0x4, fixed_abs, tag = 'smem constant byte address 0x4 - core index']
  #allocation1 [shape = 'u32[144,128]{1,0:T(1,128)}', space=vmem, size = 0x12000, scoped, tag = 'internal scratch']
  #allocation2 [shape = 's32[1]{0}', space=sflag, size = 0x4, scoped, tag = 'scoped memory for tpu_custom_call.1']
  #allocation3 [shape = 'u8[512]{0}', space=smem, size = 0x200, scoped, tag = 'prefetched SMEM operand 0']
  %s0 = inlined_call_operand.hbm [shape: f32[2], index: 0, kind: input, shape index: {}]
  %s1 = inlined_call_operand.vmem [shape: f32[1,256], index: 1, kind: input, shape index: {}]
  %s2 = inlined_call_operand.hbm [shape: f32[2,4,256], index: 2, kind: input, shape index: {}]
  %s3 = inlined_call_operand.hbm [shape: f32[2,4,256], index: 3, kind: output, shape index: {}]
  %s4 = sld [smem:[#allocation0]]
  $region45: #{tpu_custom_call.1} parent=0
    _
  %s6 = ssub.s32 1, %s4
  %s7 = scalar_select 0, %s6, %s4
  %9 = dma.hbm_to_smem %s0, 16, [#allocation3], [#allocation2]
  %10 = dma.done [#allocation2], 16
  %11 = sfence
  $region1: #{tpu_custom_call.1} parent=0
    #allocation4 [shape = 'u8[8192]{0}', space=vmem, size = 0x2000, scoped, tag = 'input window, operand 2']
    #allocation5 [shape = 's32[2]{0}', space=sflag, size = 0x8, scoped, tag = 'scoped memory for tpu_custom_call.1']
    #allocation6 [shape = 's32[2]{0}', space=sflag, size = 0x8, scoped, tag = 'scoped memory for tpu_custom_call.1']
    #allocation7 [shape = 'u8[8192]{0}', space=vmem, size = 0x2000, scoped, tag = 'output window, operand 0']
    %12 = vsyncpa [#allocation5], 0
    %s13 = scalar_lea.sflag [#allocation5], 1
    %14 = vsyncpa %s13, 0
    %15 = vsyncpa [#allocation6], 0
    %s16 = scalar_lea.sflag [#allocation6], 1
    %17 = vsyncpa %s16, 0
    loop: start=0, step=1, limit=4
    $region2: #{tpu_custom_call.1} parent=1 // loop_pre_header
      _
    $region3: #{tpu_custom_call.1} parent=1 // loop_header
      %s19 = sphi 0, %s23
      %p20 = scmp.ge.s32.totalorder %s19, 4
      %s26 = sphi 0, %s38
      %s27 = sphi 0, %s34
      %s28 = sphi 0, %s26
      %s29 = sphi 0, %s27
      %s30 = sphi 0, %s28
      %s31 = sphi 0, %s29
      %s41 = sphi 0, %s43
      %s44 = sphi 0, %s41
      %s45 = sphi 0, %s44
      %s61 = sphi 0, %s45
      %s69 = sphi 0, %s71
      %s72 = sphi 0, %s69
      %s73 = sphi 0, %s72
      %s89 = sphi 0, %s73
      %s97 = sphi 0, %s99
      %s100 = sphi 0, %s97
      %s101 = sphi 0, %s100
      %s117 = sphi 0, %s101
    $region4: #{tpu_custom_call.1} parent=1 // loop_header_branch
      %22 = sbr.rel (%p20) target = $region8
    $region5: #{tpu_custom_call.1} parent=1 // loop_body
      %s24 = ssub.s32 %s19, 1
      %s25 = ssub.s32 %s19, 2
      %s32 = sadd.s32 1, %s27
      %p33 = scmp.ge.s32.totalorder %s32, 2
      %s34 = scalar_select %p33, 0, %s32
      %s35 = sadd.s32 1, %s26
      %s36 = scalar_select %p33, %s35, %s26
      %p37 = scmp.ge.s32.totalorder %s36, 1
      %s38 = scalar_select %p37, 0, %s36
      %s39 = ssub.s32 %s26, %s38
      %p40 = scmp.eq.s32.totalorder %s39, 0
      %s42 = sadd.s32 %s41, 1
      %s43 = scalar_select %p40, %s41, %s42
      %p46 = pneg %p40
      %p47 = scmp.eq.s32.totalorder %s19, 1
      %p48 = por %p46, %p47
      %p49 = scmp.ne.s32.totalorder %s41, %s44
      %p50 = scmp.eq.s32.totalorder %s19, 0
      %p51 = por %p49, %p50
      %p52 = scmp.ne.s32.totalorder %s41, %s44
      %p53 = scmp.eq.s32.totalorder %s24, 1
      %p54 = por %p52, %p53
      %p55 = scmp.ne.s32.totalorder %s44, %s45
      %p56 = scmp.eq.s32.totalorder %s24, 0
      %p57 = por %p55, %p56
      %p58 = scmp.ne.s32.totalorder %s44, %s45
      %p59 = scmp.eq.s32.totalorder %s25, 1
      %p60 = por %p58, %p59
      %p62 = scmp.ne.s32.totalorder %s45, %s61
      %p63 = scmp.eq.s32.totalorder %s25, 0
      %p64 = por %p62, %p63
      %s65 = ssub.s32 %s27, %s34
      %s66 = ssub.s32 %s26, %s38
      %s67 = sor.u32 %s65, %s66
      %p68 = scmp.eq.s32.totalorder %s67, 0
      %s70 = sadd.s32 %s69, 1
      %s71 = scalar_select %p68, %s69, %s70
      %p74 = pneg %p68
      %p75 = scmp.eq.s32.totalorder %s19, 1
      %p76 = por %p74, %p75
      %p77 = scmp.ne.s32.totalorder %s69, %s72
      %p78 = scmp.eq.s32.totalorder %s19, 0
      %p79 = por %p77, %p78
      %p80 = scmp.ne.s32.totalorder %s69, %s72
      %p81 = scmp.eq.s32.totalorder %s24, 1
      %p82 = por %p80, %p81
      %p83 = scmp.ne.s32.totalorder %s72, %s73
      %p84 = scmp.eq.s32.totalorder %s24, 0
      %p85 = por %p83, %p84
      %p86 = scmp.ne.s32.totalorder %s72, %s73
      %p87 = scmp.eq.s32.totalorder %s25, 1
      %p88 = por %p86, %p87
      %p90 = scmp.ne.s32.totalorder %s73, %s89
      %p91 = scmp.eq.s32.totalorder %s25, 0
      %p92 = por %p90, %p91
      %s93 = ssub.s32 %s27, %s34
      %s94 = ssub.s32 %s26, %s38
      %s95 = sor.u32 %s93, %s94
      %p96 = scmp.eq.s32.totalorder %s95, 0
      %s98 = sadd.s32 %s97, 1
      %s99 = scalar_select %p96, %s97, %s98
      %p102 = pneg %p96
      %p103 = scmp.eq.s32.totalorder %s19, 1
      %p104 = por %p102, %p103
      %p105 = scmp.ne.s32.totalorder %s97, %s100
      %p106 = scmp.eq.s32.totalorder %s19, 0
      %p107 = por %p105, %p106
      %p108 = scmp.ne.s32.totalorder %s97, %s100
      %p109 = scmp.eq.s32.totalorder %s24, 1
      %p110 = por %p108, %p109
      %p111 = scmp.ne.s32.totalorder %s100, %s101
      %p112 = scmp.eq.s32.totalorder %s24, 0
      %p113 = por %p111, %p112
      %p114 = scmp.ne.s32.totalorder %s100, %s101
      %p115 = scmp.eq.s32.totalorder %s25, 1
      %p116 = por %p114, %p115
      %p118 = scmp.ne.s32.totalorder %s101, %s117
      %p119 = scmp.eq.s32.totalorder %s25, 0
      %p120 = por %p118, %p119
      %p121 = scmp.le.s32.totalorder 1, %s19
      %p122 = scmp.lt.s32.totalorder %s19, 3
      %p123 = pnand %p121, %p122
      %p124 = pneg %p123
      // Predicated region
      $region9: #{tpu_custom_call.1} parent=5 // pred_check
        _
      $region10: #{tpu_custom_call.1} parent=5 // pred_check_branch
        %126 = sbr.rel (%p123) target = $region12
      $region11: #{tpu_custom_call.1} parent=5 // pred_region
        %s127 = ssub.s32 %s19, 1
        // Predicated region
        $region13: #{tpu_custom_call.1} parent=11 // pred_check
          %p128 = pneg %p57
        $region14: #{tpu_custom_call.1} parent=11 // pred_check_branch
          %130 = sbr.rel (%p128) target = $region16
        $region15: #{tpu_custom_call.1} parent=11 // pred_region
          %s131 = smul.u32 2, %s28
          %p132 = scmp.lt.s32.totalorder %s131, 1
          %s133 = scalar_select %p132, %s131, 1
          %s134 = scalar_lea.vmem %s1, %s133
          %s135 = smul.u32 2, %s28
        $region16: #{tpu_custom_call.1} parent=11 // pred_fallthru
          _
      $region12: #{tpu_custom_call.1} parent=5 // pred_fallthru
        _
      %p136 = scmp.lt.s32.totalorder %s19, 2
      // Predicated region
      $region17: #{tpu_custom_call.1} parent=5 // pred_check
        %p137 = pneg %p136
      $region18: #{tpu_custom_call.1} parent=5 // pred_check_branch
        %139 = sbr.rel (%p137) target = $region20
      $region19: #{tpu_custom_call.1} parent=5 // pred_region
        // Predicated region
        $region21: #{tpu_custom_call.1} parent=19 // pred_check
          %p140 = pneg %p79
        $region22: #{tpu_custom_call.1} parent=19 // pred_check_branch
          %142 = sbr.rel (%p140) target = $region24
        $region23: #{tpu_custom_call.1} parent=19 // pred_region
          %s143 = sand.u32 %s69, 1
          %s144 = scalar_lea.sflag [#allocation5], %s143
          %s145 = sand.u32 %s69, 1
          %s146 = smul.addr %s145, 8
          %s147 = scalar_lea.vmem [#allocation4], %s146
          %s148 = smul.u32 2, %s26
          %s150 = ssub.s32 128, 128
          %151 = vsyncadd %s144, %s150
          %s152 = smul.addr %s27, 2
          %s153 = sadd.s32 %s148, %s152
          %s154 = smul.addr %s153, 64
          %s155 = scalar_lea.hbm %s2, %s154
          %s157 = sshll.u32 %s147, 4
          %s158 = int_to_ptr.vmem [resolvable:$true] %s157
          %160 = dma.hbm_to_vmem [thread:$0]  %s155, 128, %s158, %s144
        $region24: #{tpu_custom_call.1} parent=19 // pred_fallthru
          _
      $region20: #{tpu_custom_call.1} parent=5 // pred_fallthru
        _
      %p161 = scmp.le.s32.totalorder 1, %s19
      %p162 = scmp.lt.s32.totalorder %s19, 3
      %p163 = pnand %p161, %p162
      %p164 = pneg %p163
      // Predicated region
      $region25: #{tpu_custom_call.1} parent=5 // pred_check
        _
      $region26: #{tpu_custom_call.1} parent=5 // pred_check_branch
        %166 = sbr.rel (%p163) target = $region28
      $region27: #{tpu_custom_call.1} parent=5 // pred_region
        %s167 = ssub.s32 %s19, 1
        %s168 = sand.u32 %s72, 1
        %s169 = scalar_lea.sflag [#allocation5], %s168
        %s170 = sand.u32 %s72, 1
        %s171 = smul.addr %s170, 8
        %s172 = scalar_lea.vmem [#allocation4], %s171
        // Predicated region
        $region29: #{tpu_custom_call.1} parent=27 // pred_check
          %p173 = pneg %p85
        $region30: #{tpu_custom_call.1} parent=27 // pred_check_branch
          %175 = sbr.rel (%p173) target = $region32
        $region31: #{tpu_custom_call.1} parent=27 // pred_region
          %176 = dma.done %s169, 128
        $region32: #{tpu_custom_call.1} parent=27 // pred_fallthru
          _
        %s177 = smul.u32 2, %s28
        %p178 = scmp.lt.s32.totalorder %s177, 1
        %s179 = scalar_select %p178, %s177, 1
        %s180 = scalar_lea.vmem %s1, %s179
        %p181 = pneg %p57
        %p182 = pneg %p54
        %s183 = sand.u32 %s72, 1
        %s184 = scalar_lea.sflag [#allocation5], %s183
        %s185 = sand.u32 %s72, 1
        %s186 = smul.addr %s185, 8
        %s187 = scalar_lea.vmem [#allocation4], %s186
        %p188 = pneg %p85
        %p189 = pneg %p82
        %p190 = pneg %p113
        %p191 = pneg %p110
        %s192 = sand.u32 %s100, 1
        %s193 = scalar_lea.sflag [#allocation6], %s192
        %s194 = sand.u32 %s100, 1
        %s195 = smul.addr %s194, 8
        %s196 = scalar_lea.vmem [#allocation7], %s195
        %s197 = smul.u32 2, %s28
        %p198 = scmp.lt.s32.totalorder %s197, 1
        %s199 = scalar_select %p198, %s197, 1
        %s200 = scalar_lea.vmem %s1, %s199
        %s201 = smul.u32 2, %s28
        %s202 = smul.u32 2, %s28
        %s203 = smul.u32 2, %s28
        %s204 = sld [smem:[#allocation3 + %s29]]
        %v205 = vld [vmem:[%s200] sm:$0x3]
        %v206 = vstv %s204
        %v207 = vmul.f32 %v205, %v206
        %v208 = vsub.f32 0.0, %v207
        %v209 = vmul.f32 %v208, 1.442695
        %v210 = vpow.pop %v209
        %v211 = vsub.f32 1.0, %v210
        %v212 = vld [vmem:[%s172] sm:$0xff]
        %v214 = vlaneseq
        %v215 = vshrl.u32 %v214, 7
        %v216 = vsub.s32 0, %v215
        %v217 = vrot.slane %v211, %v216
        %v218 = vlaneseq
        %v219 = vshrl.u32 %v218, 7
        %v220 = vsub.s32 1, %v219
        %v221 = vrot.slane %v211, %v220
        %v222 = vcombine.low %v217, %v221
        %v224 = vmul.f32 %v212, %v222
        %225 = vst [vmem:[%s196] sm:$0xff] %v224
        %s226 = sand.u32 %s100, 1
        %s227 = scalar_lea.sflag [#allocation6], %s226
        %s228 = sand.u32 %s100, 1
        %s229 = smul.addr %s228, 8
        %s230 = scalar_lea.vmem [#allocation7], %s229
        // Predicated region
        $region33: #{tpu_custom_call.1} parent=27 // pred_check
          %p231 = pneg %p110
        $region34: #{tpu_custom_call.1} parent=27 // pred_check_branch
          %233 = sbr.rel (%p231) target = $region36
        $region35: #{tpu_custom_call.1} parent=27 // pred_region
          %s234 = smul.u32 2, %s28
          %s236 = ssub.s32 128, 128
          %237 = vsyncadd %s227, %s236
          %s238 = smul.addr %s29, 2
          %s239 = sadd.s32 %s234, %s238
          %s240 = smul.addr %s239, 64
          %s241 = scalar_lea.hbm %s3, %s240
          %s243 = sshll.u32 %s230, 4
          %s244 = int_to_ptr.vmem [resolvable:$true] %s243
          %246 = dma.vmem_to_hbm [thread:$0]  %s244, 128, %s241, %s227
        $region36: #{tpu_custom_call.1} parent=27 // pred_fallthru
          _
      $region28: #{tpu_custom_call.1} parent=5 // pred_fallthru
        _
      %p247 = scmp.le.s32.totalorder 2, %s19
      // Predicated region
      $region37: #{tpu_custom_call.1} parent=5 // pred_check
        %p248 = pneg %p247
      $region38: #{tpu_custom_call.1} parent=5 // pred_check_branch
        %250 = sbr.rel (%p248) target = $region40
      $region39: #{tpu_custom_call.1} parent=5 // pred_region
        %s251 = ssub.s32 %s19, 2
        // Predicated region
        $region41: #{tpu_custom_call.1} parent=39 // pred_check
          %p252 = pneg %p116
        $region42: #{tpu_custom_call.1} parent=39 // pred_check_branch
          %254 = sbr.rel (%p252) target = $region44
        $region43: #{tpu_custom_call.1} parent=39 // pred_region
          %s255 = sand.u32 %s101, 1
          %s256 = scalar_lea.sflag [#allocation6], %s255
          %s257 = sand.u32 %s101, 1
          %s258 = smul.addr %s257, 8
          %s259 = scalar_lea.vmem [#allocation7], %s258
          %260 = dma.done %s256, 128
        $region44: #{tpu_custom_call.1} parent=39 // pred_fallthru
          _
      $region40: #{tpu_custom_call.1} parent=5 // pred_fallthru
        _
    $region6: #{tpu_custom_call.1} parent=1 // loop_footer
      %s23 = sadd.s32 1, %s19
    $region7: #{tpu_custom_call.1} parent=1 // loop_footer_branch
      %18 = sbr.rel target = $region3
    $region8: #{tpu_custom_call.1} parent=1 // loop_exit
      _
    %261 = vsyncpa [#allocation5], 1
    %s262 = scalar_lea.sflag [#allocation5], 1
    %263 = vsyncpa %s262, 1
    %264 = vsyncpa [#allocation6], 1
    %s265 = scalar_lea.sflag [#allocation6], 1
    %266 = vsyncpa %s265, 1

</llo_original>
